<compile_context>
chip_gen: v7x
topology: tpu7x:2x2x1
jax: 0.10.0
libtpu: 0.0.40
codegen_flags: <defaults>
</compile_context>

<pallas_src>
import jax
import jax.numpy as jnp
from jax.experimental import pallas as pl
from jax.experimental.pallas import tpu as pltpu

LANES = 128
# Per-input VMEM block budget.  2 MiB/block * 2 inputs * 2 pipeline buffers
# ~= 8 MiB, inside every generation's scoped-VMEM budget (we raise the limit
# to 32 MiB for margin; v7x physical VMEM is 64 MiB so headroom remains).
TILE_BYTES = 2 * 1024 * 1024
WEIGHTS = (0.4, 0.6)


def _make_kernel(rows, tile_r, tiles_per_split, acc_rows, any_tail,
                 binary_truth):
    """Builds the streaming-reduction kernel body."""

    if acc_rows == 8:
        sub = tile_r // 8

        def fold(v):
            # Pre-reduce the (tile_r, 128) tile to a fixed (8, 128) partial so
            # accumulator load/store traffic is constant regardless of tile_r.
            return v.reshape(sub, 8, LANES).sum(axis=0)
    else:  # tiny single-tile case where tile_r == rows is not a multiple of 8

        def fold(v):
            return v.sum(axis=0, keepdims=True)

    def kernel(p_ref, t_ref, acc_ref):
        c = pl.program_id(0)   # megacore split
        i = pl.program_id(1)   # row-tile within the split

        @pl.when(i == 0)
        def _init():
            acc_ref[...] = jnp.zeros_like(acc_ref)

        def accumulate(masked):
            p = p_ref[...].astype(jnp.float32)
            t = t_ref[...].astype(jnp.float32)

            if masked:
                # Rows past the real data (partial edge block and/or the
                # phantom tile from the clamped index_map) are forced to
                # neutral values *before* the log, so garbage can never reach
                # jnp.log and leak NaN/Inf through the sums.
                row = ((c * tiles_per_split + i) * tile_r
                       + jax.lax.broadcasted_iota(jnp.int32,
                                                  (tile_r, LANES), 0))
                valid = row < rows
                neutral = 0.0 if binary_truth else 0.5
                p = jnp.where(valid, p, neutral)
                t = jnp.where(valid, t, neutral)

            if binary_truth:
                # One EUP log / element; exact for 0/1 truth.  The (p=0, t=0)
                # neutral value contributes 0 everywhere; the neg count is
                # recovered as n - pos_count in the wrapper.
                is_pos = t > 0.5
                nll = -jnp.maximum(jnp.log(jnp.where(is_pos, p, 1.0 - p)),
                                   -100.0)
                acc_ref[0, 0] += fold(t)                            # pos count
                acc_ref[0, 1] += fold(jnp.where(is_pos, nll, 0.0))  # pos loss
                acc_ref[0, 2] += fold(jnp.where(is_pos, 0.0, nll))  # neg loss
            else:
                # Exact F.binary_cross_entropy (log terms clamped at -100) for
                # soft labels.  Two logs/element -- may bind on v5e's lone EUP.
                pos = (t > 0.5).astype(jnp.float32)
                neg = (t < 0.5).astype(jnp.float32)
                bce = -(t * jnp.maximum(jnp.log(p), -100.0)
                        + (1.0 - t) * jnp.maximum(jnp.log(1.0 - p), -100.0))
                acc_ref[0, 0] += fold(pos)
                acc_ref[0, 1] += fold(neg)
                acc_ref[0, 2] += fold(pos * bce)
                acc_ref[0, 3] += fold(neg * bce)

        if any_tail:
            # Only tiles that extend past the real data pay for the masking;
            # interior tiles take the lean unmasked path.
            tile_end = (c * tiles_per_split + i + 1) * tile_r
            is_tail = tile_end > rows

            @pl.when(is_tail)
            def _masked():
                accumulate(True)

            @pl.when(jnp.logical_not(is_tail))
            def _interior():
                accumulate(False)
        else:
            accumulate(False)

    return kernel


def weighted_bce(logit_pixel, truth_pixel, weights=WEIGHTS,
                 assume_binary_truth=True):
    """WeightedBCE forward pass.

    probs/truth may be float32 or bfloat16 (bf16 halves HBM traffic on this
    memory-bound kernel; 0/1 truth is exact in bf16 -- do NOT cast in a
    wrapper, feed bf16 directly).  With assume_binary_truth=True (default,
    fast path) truth must contain only 0.0/1.0; pass False for soft labels to
    get the exact two-log BCE of F.binary_cross_entropy.
    """
    p = logit_pixel.reshape(-1)
    t = truth_pixel.reshape(-1)
    assert p.shape == t.shape
    n = p.shape[0]

    # Lane alignment only (128).  For 128-aligned sizes the (rows, 128) view
    # is a free reshape -- no padding copy at all.  Row-tile alignment is
    # handled by Pallas partial edge blocks + the in-kernel tail mask.
    n_pad = (-n) % LANES
    if n_pad:
        # TODO(synk): 128-unaligned sizes still pay one extra HBM pass for the
        # concatenate; a scalar-prefetched length + lane-level mask on the
        # last block would remove it.
        neutral = 0.0 if assume_binary_truth else 0.5
        p = jnp.concatenate([p, jnp.full((n_pad,), neutral, p.dtype)])
        t = jnp.concatenate([t, jnp.full((n_pad,), neutral, t.dtype)])

    rows = (n + n_pad) // LANES
    p2 = p.reshape(rows, LANES)          # free reshape (contiguous)
    t2 = t.reshape(rows, LANES)

    itemsize = max(p.dtype.itemsize, t.dtype.itemsize)
    tile_max = TILE_BYTES // (LANES * itemsize)   # 4096 rows f32 / 8192 bf16
    if rows <= tile_max:
        tile_r = rows        # single full-extent block (exempt from %8 rule)
    else:
        tile_r = tile_max    # multiple of 8
    acc_rows = 8 if tile_r % 8 == 0 else 1

    n_tiles = pl.cdiv(rows, tile_r)
    # Always split 2-way when there is more than one tile so a v7x TensorCore
    # never idles; odd tile counts get a phantom tile (clamped index_map,
    # fully masked in-kernel).  On 1-TC chips this is a tiny outer serial loop.
    # TODO(synk): verify with a trace that "parallel" shards across the two
    # v7x TensorCores; if not, switch that axis to pltpu.CORE_PARALLEL.
    n_splits = 2 if n_tiles >= 2 else 1
    tiles_per_split = pl.cdiv(n_tiles, n_splits)
    has_phantom = n_splits * tiles_per_split != n_tiles
    any_tail = has_phantom or (rows % tile_r != 0)

    last_block = n_tiles - 1
    if has_phantom:
        def in_map(c, i):
            return (jnp.minimum(c * tiles_per_split + i, last_block), 0)
    else:
        def in_map(c, i):
            return (c * tiles_per_split + i, 0)

    n_acc = 3 if assume_binary_truth else 4
    kernel = _make_kernel(rows, tile_r, tiles_per_split, acc_rows, any_tail,
                          assume_binary_truth)

    n_eff = rows * LANES
    cost = pl.CostEstimate(
        flops=10 * n_eff,
        transcendentals=(1 if assume_binary_truth else 2) * n_eff,
        bytes_accessed=n_eff * (p.dtype.itemsize + t.dtype.itemsize)
        + n_splits * n_acc * acc_rows * LANES * 4,
    )

    partials = pl.pallas_call(
        kernel,
        out_shape=jax.ShapeDtypeStruct((n_splits, n_acc, acc_rows, LANES),
                                       jnp.float32),
        grid_spec=pltpu.PrefetchScalarGridSpec(
            num_scalar_prefetch=0,
            grid=(n_splits, tiles_per_split),
            in_specs=[
                pl.BlockSpec((tile_r, LANES), in_map),
                pl.BlockSpec((tile_r, LANES), in_map),
            ],
            # Output block doubles as the accumulator (resident across the
            # inner "arbitrary" axis; one block per split).
            out_specs=pl.BlockSpec((1, n_acc, acc_rows, LANES),
                                   lambda c, i: (c, 0, 0, 0)),
        ),
        compiler_params=pltpu.CompilerParams(
            dimension_semantics=("parallel", "arbitrary"),
            vmem_limit_bytes=32 * 1024 * 1024),
        cost_estimate=cost,
    )(p2, t2)

    sums = partials.sum(axis=(0, 2, 3))
    if assume_binary_truth:
        pos_cnt = sums[0]
        neg_cnt = jnp.asarray(n, jnp.float32) - pos_cnt   # n is static
        pos_loss, neg_loss = sums[1], sums[2]
    else:
        pos_cnt, neg_cnt, pos_loss, neg_loss = sums[0], sums[1], sums[2], sums[3]

    # TODO(synk): PyTorch calls .item() (host sync) on pos/neg counts; the
    # equivalent scalar math stays on-device here (numerically identical).
    return (weights[0] * pos_loss / (pos_cnt + 1e-12)
            + weights[1] * neg_loss / (neg_cnt + 1e-12))


def _reference(logit_pixel, truth_pixel, weights=WEIGHTS):
    p = logit_pixel.reshape(-1).astype(jnp.float32)
    t = truth_pixel.reshape(-1).astype(jnp.float32)
    bce = -(t * jnp.maximum(jnp.log(p), -100.0)
            + (1.0 - t) * jnp.maximum(jnp.log(1.0 - p), -100.0))
    pos = (t > 0.5).astype(jnp.float32)
    neg = (t < 0.5).astype(jnp.float32)
    return (weights[0] * jnp.sum(pos * bce) / (jnp.sum(pos) + 1e-12)
            + weights[1] * jnp.sum(neg * bce) / (jnp.sum(neg) + 1e-12))


if __name__ == "__main__":
    key = jax.random.PRNGKey(0)
    ks = jax.random.split(key, 8)

    def check(got, want, rtol=1e-5, atol=1e-5, msg=""):
        assert jnp.allclose(got, want, rtol=rtol, atol=atol), (msg, got, want)

    # 1) Primary small test: NCHW probabilities in (0,1), binary truth,
    #    single row tile (rows = 16).
    lp = jax.nn.sigmoid(jax.random.normal(ks[0], (2, 4, 16, 16), jnp.float32))
    tp = (jax.random.uniform(ks[1], (2, 4, 16, 16)) > 0.5).astype(jnp.float32)
    out = jax.block_until_ready(weighted_bce(lp, tp))
    check(out, _reference(lp, tp), msg="small/binary")

    # 2) bf16 inputs (half the HBM bytes; kernel upcasts internally).
    out_bf = jax.block_until_ready(
        weighted_bce(lp.astype(jnp.bfloat16), tp.astype(jnp.bfloat16)))
    ref_bf = _reference(lp.astype(jnp.bfloat16), tp.astype(jnp.bfloat16))
    check(out_bf, ref_bf, rtol=1e-4, atol=1e-4, msg="bf16")

    # 3) Multi-tile path: 2-way megacore split, odd tile count (clamped
    #    phantom tile), partial edge block and a 128-unaligned element count.
    shape3 = (3, 3, 350, 350)            # 1_102_500 elems -> 3 row tiles
    lp3 = jax.nn.sigmoid(jax.random.normal(ks[2], shape3, jnp.float32))
    tp3 = (jax.random.uniform(ks[3], shape3) > 0.5).astype(jnp.float32)
    out3 = jax.block_until_ready(weighted_bce(lp3, tp3))
    check(out3, _reference(lp3, tp3), rtol=1e-4, atol=1e-5, msg="multi-tile")

    # 4) Soft labels -> exact two-log BCE path.
    tp4 = jax.random.uniform(ks[4], (2, 4, 16, 16), jnp.float32)
    out4 = jax.block_until_ready(
        weighted_bce(lp, tp4, assume_binary_truth=False))
    check(out4, _reference(lp, tp4), msg="soft labels")

    print("KERNEL_OK")
</pallas_src>

<mosaic_0001>
module attributes {stable_mosaic.version = 11 : i64} {
  func.func @kernel(%arg0: i32, %arg1: i32, %arg2: memref<16x128xf32, #tpu.memory_space<vmem>>, %arg3: memref<16x128xf32, #tpu.memory_space<vmem>>, %arg4: memref<1x3x8x128xf32, #tpu.memory_space<vmem>>) attributes {dimension_semantics = [#tpu.dimension_semantics<parallel>, #tpu.dimension_semantics<arbitrary>], iteration_bounds = array<i64: 1, 1>, scalar_prefetch = 0 : i64, scratch_operands = 0 : i64, tpu.core_type = #tpu.core_type<tc>, window_params = [{transform_indices = @transform_0, window_bounds = array<i64: 16, 128>}, {transform_indices = @transform_1, window_bounds = array<i64: 16, 128>}, {transform_indices = @transform_2, window_bounds = array<i64: 1, 3, 8, 128>}]} {
    %c0_i32 = arith.constant 0 : i32
    %0 = arith.cmpi eq, %arg1, %c0_i32 : i32
    %1 = arith.extui %0 : i1 to i32
    %c0_i32_0 = arith.constant 0 : i32
    %2 = arith.cmpi ne, %1, %c0_i32_0 : i32
    scf.if %2 {
      %cst_34 = arith.constant 0.000000e+00 : f32
      %43 = vector.broadcast %cst_34 : f32 to vector<1x3x8x128xf32>
      %c0_35 = arith.constant 0 : index
      %c0_36 = arith.constant 0 : index
      %c0_37 = arith.constant 0 : index
      %c0_38 = arith.constant 0 : index
      %44 = vector.load %arg4[%c0_35, %c0_36, %c0_37, %c0_38] : memref<1x3x8x128xf32, #tpu.memory_space<vmem>>, vector<1x3x8x128xf32>
      tpu.vector_store %arg4[%c0_35, %c0_36, %c0_37, %c0_38], %43 {strides = array<i32>} : memref<1x3x8x128xf32, #tpu.memory_space<vmem>>, vector<1x3x8x128xf32>,
    } else {
    }
    %c0 = arith.constant 0 : index
    %c0_1 = arith.constant 0 : index
    %3 = vector.load %arg2[%c0, %c0_1] : memref<16x128xf32, #tpu.memory_space<vmem>>, vector<16x128xf32>
    %c0_2 = arith.constant 0 : index
    %c0_3 = arith.constant 0 : index
    %4 = vector.load %arg3[%c0_2, %c0_3] : memref<16x128xf32, #tpu.memory_space<vmem>>, vector<16x128xf32>
    %cst = arith.constant 5.000000e-01 : f32
    %5 = vector.broadcast %cst : f32 to vector<16x128xf32>
    %6 = arith.cmpf ogt, %4, %5 : vector<16x128xf32>
    %cst_4 = arith.constant 1.000000e+00 : f32
    %7 = vector.broadcast %cst_4 : f32 to vector<16x128xf32>
    %8 = arith.subf %7, %3 : vector<16x128xf32>
    %9 = arith.select %6, %3, %8 : vector<16x128xi1>, vector<16x128xf32>
    %10 = math.log %9 : vector<16x128xf32>
    %cst_5 = arith.constant -1.000000e+02 : f32
    %11 = vector.broadcast %cst_5 : f32 to vector<16x128xf32>
    %12 = arith.maximumf %10, %11 : vector<16x128xf32>
    %cst_6 = arith.constant 0.000000e+00 : f32
    %13 = vector.broadcast %cst_6 : f32 to vector<16x128xf32>
    %14 = arith.subf %13, %12 : vector<16x128xf32>
    %c0_7 = arith.constant 0 : index
    %c0_8 = arith.constant 0 : index
    %c0_9 = arith.constant 0 : index
    %c0_10 = arith.constant 0 : index
    %15 = vector.load %arg4[%c0_7, %c0_8, %c0_9, %c0_10] : memref<1x3x8x128xf32, #tpu.memory_space<vmem>>, vector<1x1x8x128xf32>
    %16 = vector.shape_cast %15 : vector<1x1x8x128xf32> to vector<8x128xf32>
    %17 = vector.shape_cast %4 : vector<16x128xf32> to vector<2x8x128xf32>
    %cst_11 = arith.constant dense<0.000000e+00> : vector<8x128xf32>
    %18 = vector.multi_reduction <add>, %17, %cst_11 [0] : vector<2x8x128xf32> to vector<8x128xf32>
    %19 = arith.addf %16, %18 : vector<8x128xf32>
    %c0_12 = arith.constant 0 : index
    %c0_13 = arith.constant 0 : index
    %c0_14 = arith.constant 0 : index
    %c0_15 = arith.constant 0 : index
    %20 = vector.load %arg4[%c0_12, %c0_13, %c0_14, %c0_15] : memref<1x3x8x128xf32, #tpu.memory_space<vmem>>, vector<1x1x8x128xf32>
    %21 = vector.shape_cast %20 : vector<1x1x8x128xf32> to vector<8x128xf32>
    %22 = vector.shape_cast %19 : vector<8x128xf32> to vector<1x1x8x128xf32>
    tpu.vector_store %arg4[%c0_12, %c0_13, %c0_14, %c0_15], %22 {strides = array<i32>} : memref<1x3x8x128xf32, #tpu.memory_space<vmem>>, vector<1x1x8x128xf32>,
    %c0_16 = arith.constant 0 : index
    %c1 = arith.constant 1 : index
    %c0_17 = arith.constant 0 : index
    %c0_18 = arith.constant 0 : index
    %23 = vector.load %arg4[%c0_16, %c1, %c0_17, %c0_18] : memref<1x3x8x128xf32, #tpu.memory_space<vmem>>, vector<1x1x8x128xf32>
    %24 = vector.shape_cast %23 : vector<1x1x8x128xf32> to vector<8x128xf32>
    %cst_19 = arith.constant 0.000000e+00 : f32
    %25 = vector.broadcast %cst_19 : f32 to vector<16x128xf32>
    %26 = arith.select %6, %14, %25 : vector<16x128xi1>, vector<16x128xf32>
    %27 = vector.shape_cast %26 : vector<16x128xf32> to vector<2x8x128xf32>
    %cst_20 = arith.constant dense<0.000000e+00> : vector<8x128xf32>
    %28 = vector.multi_reduction <add>, %27, %cst_20 [0] : vector<2x8x128xf32> to vector<8x128xf32>
    %29 = arith.addf %24, %28 : vector<8x128xf32>
    %c0_21 = arith.constant 0 : index
    %c1_22 = arith.constant 1 : index
    %c0_23 = arith.constant 0 : index
    %c0_24 = arith.constant 0 : index
    %30 = vector.load %arg4[%c0_21, %c1_22, %c0_23, %c0_24] : memref<1x3x8x128xf32, #tpu.memory_space<vmem>>, vector<1x1x8x128xf32>
    %31 = vector.shape_cast %30 : vector<1x1x8x128xf32> to vector<8x128xf32>
    %32 = vector.shape_cast %29 : vector<8x128xf32> to vector<1x1x8x128xf32>
    tpu.vector_store %arg4[%c0_21, %c1_22, %c0_23, %c0_24], %32 {strides = array<i32>} : memref<1x3x8x128xf32, #tpu.memory_space<vmem>>, vector<1x1x8x128xf32>,
    %c0_25 = arith.constant 0 : index
    %c2 = arith.constant 2 : index
    %c0_26 = arith.constant 0 : index
    %c0_27 = arith.constant 0 : index
    %33 = vector.load %arg4[%c0_25, %c2, %c0_26, %c0_27] : memref<1x3x8x128xf32, #tpu.memory_space<vmem>>, vector<1x1x8x128xf32>
    %34 = vector.shape_cast %33 : vector<1x1x8x128xf32> to vector<8x128xf32>
    %cst_28 = arith.constant 0.000000e+00 : f32
    %35 = vector.broadcast %cst_28 : f32 to vector<16x128xf32>
    %36 = arith.select %6, %35, %14 : vector<16x128xi1>, vector<16x128xf32>
    %37 = vector.shape_cast %36 : vector<16x128xf32> to vector<2x8x128xf32>
    %cst_29 = arith.constant dense<0.000000e+00> : vector<8x128xf32>
    %38 = vector.multi_reduction <add>, %37, %cst_29 [0] : vector<2x8x128xf32> to vector<8x128xf32>
    %39 = arith.addf %34, %38 : vector<8x128xf32>
    %c0_30 = arith.constant 0 : index
    %c2_31 = arith.constant 2 : index
    %c0_32 = arith.constant 0 : index
    %c0_33 = arith.constant 0 : index
    %40 = vector.load %arg4[%c0_30, %c2_31, %c0_32, %c0_33] : memref<1x3x8x128xf32, #tpu.memory_space<vmem>>, vector<1x1x8x128xf32>
    %41 = vector.shape_cast %40 : vector<1x1x8x128xf32> to vector<8x128xf32>
    %42 = vector.shape_cast %39 : vector<8x128xf32> to vector<1x1x8x128xf32>
    tpu.vector_store %arg4[%c0_30, %c2_31, %c0_32, %c0_33], %42 {strides = array<i32>} : memref<1x3x8x128xf32, #tpu.memory_space<vmem>>, vector<1x1x8x128xf32>,
    return
  }
  func.func @transform_0(%arg0: i32, %arg1: i32) -> (i32, i32) {
    %c1_i32 = arith.constant 1 : i32
    %0 = arith.muli %arg0, %c1_i32 : i32
    %1 = arith.addi %0, %arg1 : i32
    %c0_i32 = arith.constant 0 : i32
    %c0_i32_0 = arith.constant 0 : i32
    return %1, %c0_i32 : i32, i32
  }
  func.func @transform_1(%arg0: i32, %arg1: i32) -> (i32, i32) {
    %c1_i32 = arith.constant 1 : i32
    %0 = arith.muli %arg0, %c1_i32 : i32
    %1 = arith.addi %0, %arg1 : i32
    %c0_i32 = arith.constant 0 : i32
    %c0_i32_0 = arith.constant 0 : i32
    return %1, %c0_i32 : i32, i32
  }
  func.func @transform_2(%arg0: i32, %arg1: i32) -> (i32, i32, i32, i32) {
    %c0_i32 = arith.constant 0 : i32
    %c0_i32_0 = arith.constant 0 : i32
    %c0_i32_1 = arith.constant 0 : i32
    %c0_i32_2 = arith.constant 0 : i32
    return %arg0, %c0_i32, %c0_i32_0, %c0_i32_1 : i32, i32, i32, i32
  }
}

</mosaic_0001>

<llo_original>
// kernel: tpu_custom_call.1
$region0: #{tpu_custom_call.1}
  #allocation0 [shape = 'u32[]', space=smem, size = 0x4, offset = 0x4, fixed_abs, tag = 'smem constant byte address 0x4 - core index']
  #allocation1 [shape = 'u32[144,128]{1,0:T(1,128)}', space=vmem, size = 0x12000, scoped, tag = 'internal scratch']
  %s0 = inlined_call_operand.hbm [shape: f32[16,128], index: 0, kind: input, shape index: {}]
  %s1 = inlined_call_operand.hbm [shape: f32[16,128], index: 1, kind: input, shape index: {}]
  %s2 = inlined_call_operand.hbm [shape: f32[1,3,8,128], index: 2, kind: output, shape index: {}]
  %s3 = sld [smem:[#allocation0]]
  $region30: #{tpu_custom_call.1} parent=0
    _
  %s5 = ssub.s32 1, %s3
  %s6 = scalar_select 0, %s5, %s3
  $region1: #{tpu_custom_call.1} parent=0
    #allocation2 [shape = 'u8[8192]{0}', space=vmem, size = 0x2000, scoped, tag = 'input window, operand 0, single buffered']
    #allocation3 [shape = 's32[1]{0}', space=sflag, size = 0x4, scoped, tag = 'scoped memory for tpu_custom_call.1']
    #allocation4 [shape = 's32[1]{0}', space=sflag, size = 0x4, scoped, tag = 'scoped memory for tpu_custom_call.1']
    #allocation5 [shape = 'u8[8192]{0}', space=vmem, size = 0x2000, scoped, tag = 'input window, operand 1, single buffered']
    #allocation6 [shape = 's32[1]{0}', space=sflag, size = 0x4, scoped, tag = 'scoped memory for tpu_custom_call.1']
    #allocation7 [shape = 'u8[12288]{0}', space=vmem, size = 0x3000, scoped, tag = 'output window, operand 0, single buffered']
    %7 = vsyncpa [#allocation3], 0
    %8 = vsyncpa [#allocation6], 0
    %9 = vsyncpa [#allocation4], 0
    // Predicated region
    $region2: #{tpu_custom_call.1} parent=1 // pred_check
      _
    $region3: #{tpu_custom_call.1} parent=1 // pred_check_branch
      %11 = sbr.rel (0) target = $region5
    $region4: #{tpu_custom_call.1} parent=1 // pred_region
      %s12 = sadd.s32 0, 0
      %s13 = smul.u32 2, %s12
      %s15 = ssub.s32 256, 256
      %16 = vsyncadd [#allocation3], %s15
      %s17 = smul.addr %s13, 128
      %s18 = scalar_lea.hbm %s0, %s17
      %s19 = sshll.u32 [#allocation2], 4
      %s20 = int_to_ptr.vmem [resolvable:$true] %s19
      %25 = dma.hbm_to_vmem [thread:$0]  %s18, 256, %s20, [#allocation3], 128, 128, 8
    $region5: #{tpu_custom_call.1} parent=1 // pred_fallthru
      _
    // Predicated region
    $region6: #{tpu_custom_call.1} parent=1 // pred_check
      _
    $region7: #{tpu_custom_call.1} parent=1 // pred_check_branch
      %27 = sbr.rel (0) target = $region9
    $region8: #{tpu_custom_call.1} parent=1 // pred_region
      %s28 = sadd.s32 0, 0
      %s29 = smul.u32 2, %s28
      %s31 = ssub.s32 256, 256
      %32 = vsyncadd [#allocation6], %s31
      %s33 = smul.addr %s29, 128
      %s34 = scalar_lea.hbm %s1, %s33
      %s35 = sshll.u32 [#allocation5], 4
      %s36 = int_to_ptr.vmem [resolvable:$true] %s35
      %41 = dma.hbm_to_vmem [thread:$0]  %s34, 256, %s36, [#allocation6], 128, 128, 8
    $region9: #{tpu_custom_call.1} parent=1 // pred_fallthru
      _
    // Predicated region
    $region10: #{tpu_custom_call.1} parent=1 // pred_check
      _
    $region11: #{tpu_custom_call.1} parent=1 // pred_check_branch
      %43 = sbr.rel (0) target = $region13
    $region12: #{tpu_custom_call.1} parent=1 // pred_region
      %44 = dma.done [#allocation3], 256
    $region13: #{tpu_custom_call.1} parent=1 // pred_fallthru
      _
    // Predicated region
    $region14: #{tpu_custom_call.1} parent=1 // pred_check
      _
    $region15: #{tpu_custom_call.1} parent=1 // pred_check_branch
      %46 = sbr.rel (0) target = $region17
    $region16: #{tpu_custom_call.1} parent=1 // pred_region
      %47 = dma.done [#allocation6], 256
    $region17: #{tpu_custom_call.1} parent=1 // pred_fallthru
      _
    %s48 = sadd.s32 0, 0
    %s49 = smul.u32 2, %s48
    %s50 = sadd.s32 0, 0
    %s51 = smul.u32 2, %s50
    %p52 = scmp.eq.s32.totalorder 0, 0
    // Predicated region
    $region18: #{tpu_custom_call.1} parent=1 // pred_check
      %p53 = pneg %p52
    $region19: #{tpu_custom_call.1} parent=1 // pred_check_branch
      %55 = sbr.rel (%p53) target = $region21
    $region20: #{tpu_custom_call.1} parent=1 // pred_region
      %56 = vst [vmem:[#allocation7] sm:$0xff] 0.0
      %57 = vst [vmem:[#allocation7 + $0x8] sm:$0xff] 0.0
      %58 = vst [vmem:[#allocation7 + $0x10] sm:$0xff] 0.0
    $region21: #{tpu_custom_call.1} parent=1 // pred_fallthru
      _
    %v59 = vld [vmem:[#allocation2] sm:$0xff]
    %v60 = vld [vmem:[#allocation2 + $0x8] sm:$0xff]
    %v61 = vld [vmem:[#allocation5] sm:$0xff]
    %v62 = vld [vmem:[#allocation5 + $0x8] sm:$0xff]
    %vm63 = vcmp.gt.f32.partialorder %v61, 0.5
    %vm64 = vcmp.gt.f32.partialorder %v62, 0.5
    %v65 = vsub.f32 1.0, %v59
    %v66 = vsub.f32 1.0, %v60
    %v67 = vsel %vm63, %v59, %v65
    %v68 = vsel %vm64, %v60, %v66
    %v69 = vlog2.pop %v67
    %v70 = vmul.f32 %v69, 0.6931472
    %v71 = vlog2.pop %v68
    %v72 = vmul.f32 %v71, 0.6931472
    %v73 = vmax.f32 %v70, -100.0
    %v74 = vmax.f32 %v72, -100.0
    %v75 = vsub.f32 0.0, %v73
    %v76 = vsub.f32 0.0, %v74
    %v77 = vld [vmem:[#allocation7] sm:$0xff]
    %v78 = vadd.f32 %v61, %v62
    %v79 = vadd.f32 %v77, %v78
    %80 = vst [vmem:[#allocation7] sm:$0xff] %v79
    %s81 = scalar_lea.vmem [#allocation7], 8
    %v82 = vld [vmem:[%s81] sm:$0xff]
    %v83 = vsel %vm63, %v75, 0.0
    %v84 = vsel %vm64, %v76, 0.0
    %v85 = vadd.f32 %v83, %v84
    %v86 = vadd.f32 %v82, %v85
    %87 = vst [vmem:[%s81] sm:$0xff] %v86
    %s88 = scalar_lea.vmem [#allocation7], 16
    %v89 = vld [vmem:[%s88] sm:$0xff]
    %v90 = vsel %vm63, 0.0, %v75
    %v91 = vsel %vm64, 0.0, %v76
    %v92 = vadd.f32 %v90, %v91
    %v93 = vadd.f32 %v89, %v92
    %94 = vst [vmem:[%s88] sm:$0xff] %v93
    // Predicated region
    $region22: #{tpu_custom_call.1} parent=1 // pred_check
      _
    $region23: #{tpu_custom_call.1} parent=1 // pred_check_branch
      %96 = sbr.rel (0) target = $region25
    $region24: #{tpu_custom_call.1} parent=1 // pred_region
      %s98 = ssub.s32 384, 384
      %99 = vsyncadd [#allocation4], %s98
      %s100 = sshll.u32 [#allocation7], 4
      %s101 = int_to_ptr.vmem [resolvable:$true] %s100
      %106 = dma.vmem_to_hbm [thread:$0]  %s101, 384, %s2, [#allocation4], 128, 128, 8
    $region25: #{tpu_custom_call.1} parent=1 // pred_fallthru
      _
    // Predicated region
    $region26: #{tpu_custom_call.1} parent=1 // pred_check
      _
    $region27: #{tpu_custom_call.1} parent=1 // pred_check_branch
      %108 = sbr.rel (0) target = $region29
    $region28: #{tpu_custom_call.1} parent=1 // pred_region
      %109 = dma.done [#allocation4], 384
    $region29: #{tpu_custom_call.1} parent=1 // pred_fallthru
      _
    %110 = vsyncpa [#allocation3], 1
    %111 = vsyncpa [#allocation6], 1
    %112 = vsyncpa [#allocation4], 1

</llo_original>
